<compile_context>
chip_gen: v7x
topology: tpu7x:2x2x1
jax: 0.10.0
libtpu: 0.0.40
codegen_flags: <defaults>
</compile_context>

<pallas_src>
import jax
import jax.numpy as jnp
from jax.experimental import pallas as pl
from jax.experimental.pallas import tpu as pltpu


def _round_up(n, m):
    return ((n + m - 1) // m) * m


def _proxynca_l2_lse_kernel(two_over_temp_ref, x_ref, bT_ref, bsq_ref, out_ref,
                            m_sc, l_sc):
    j = pl.program_id(1)
    n_c = pl.num_programs(1)

    @pl.when(j == 0)
    def _init():
        m_sc[...] = jnp.full_like(m_sc, -jnp.inf)
        l_sc[...] = jnp.zeros_like(l_sc)

    two_over_temp = two_over_temp_ref[0, 0]          # scalar from SMEM

    # Cross term on the MXU: (TB, Dp) x (Dp, TC) -> (TB, TC), f32 accumulate.
    cross = jax.lax.dot_general(
        x_ref[...], bT_ref[...],
        dimension_numbers=(((1,), (0,)), ((), ())),
        preferred_element_type=jnp.float32)

    # sim = -(||b||^2 - 2 x.b)/temp ; bsq_ref is already (-||b||^2 / temp),
    # the per-row ||x||^2/temp term cancels in the loss and is dropped.
    sim = cross * two_over_temp + bsq_ref[...]        # (TB, TC)

    # Online (flash-style) logsumexp over the class axis.
    m_prev = m_sc[...]
    m_new = jnp.maximum(m_prev, jnp.max(sim, axis=1, keepdims=True))
    l_sc[...] = (l_sc[...] * jnp.exp(m_prev - m_new)
                 + jnp.sum(jnp.exp(sim - m_new), axis=1, keepdims=True))
    m_sc[...] = m_new

    @pl.when(j == n_c - 1)
    def _finalize():
        out_ref[...] = m_sc[...] + jnp.log(l_sc[...])


def proxynca_l2_loss(batch, weight_v, weight_g, temp, labels, *,
                     compute_dtype=jnp.float32, tb=256, tc=512):
    """batch: (B, D) float, weight_v: (C, D), weight_g: (C,) or (C, 1),
    temp: scalar, labels: (B,) int. Returns scalar f32 loss.

    compute_dtype=jnp.bfloat16 feeds the MXU in bf16 (f32 accumulation); use
    with care — 1/temp amplifies the quantization of the cross term."""
    eps = 1e-12
    f32 = jnp.float32
    B, D = batch.shape
    C = weight_v.shape[0]

    x = jnp.asarray(batch, f32)
    wv = jnp.asarray(weight_v, f32)
    kappa = jnp.maximum(jnp.asarray(weight_g, f32).reshape(C, 1), 0.1)
    temp_f = jnp.asarray(temp, f32).reshape(())

    # Hoisted proxy prep (once per call, not per batch tile):
    #   b = normalize(weight_v) * kappa ;  ||b_c||^2 = kappa_c^2
    inv_norm = jax.lax.rsqrt(
        jnp.maximum(jnp.sum(wv * wv, axis=1, keepdims=True), eps * eps))
    b = wv * (kappa * inv_norm)                       # (C, D)
    b_sq = (kappa * kappa).reshape(C)                 # (C,)

    # Positive term sim[i, labels[i]] hoisted to the wrapper (O(B*D) XLA op),
    # in the same reduced form (row ||x||^2 term dropped) as the kernel's sim.
    # TODO(synk): out-of-range labels are clipped by jnp.take (torch would raise).
    labels_i = jnp.asarray(labels, jnp.int32)
    b_pos = jnp.take(b, labels_i, axis=0)             # (B, D)
    ksq_pos = jnp.take(b_sq, labels_i, axis=0)        # (B,)
    pos = (ksq_pos - 2.0 * jnp.sum(x * b_pos, axis=1)) * (-1.0 / temp_f)

    # Padded / tiled shapes (lane- and sublane-aligned).
    TB = min(tb, _round_up(B, 8))
    Bp = _round_up(B, TB)
    TC = min(tc, _round_up(C, 128))
    Cp = _round_up(C, TC)
    Dp = _round_up(D, 128)

    x_p = jnp.zeros((Bp, Dp), compute_dtype).at[:B, :D].set(x.astype(compute_dtype))
    # Pre-transpose proxies once: (Dp, Cp) so the kernel matmul needs no vxpose.
    bT_p = jnp.zeros((Dp, Cp), compute_dtype).at[:D, :C].set(
        b.T.astype(compute_dtype))
    # Pre-scale ||b||^2 by -1/temp; padded classes -> -inf (sim = -inf, exact
    # zero contribution to logsumexp for any temp).
    bsq_scaled = jnp.full((1, Cp), -jnp.inf, f32).at[0, :C].set(
        b_sq * (-1.0 / temp_f))
    two_over_temp = (2.0 / temp_f).reshape(1, 1)

    grid = (Bp // TB, Cp // TC)

    lse_rows = pl.pallas_call(
        _proxynca_l2_lse_kernel,
        out_shape=jax.ShapeDtypeStruct((Bp, 1), f32),
        grid_spec=pltpu.PrefetchScalarGridSpec(
            num_scalar_prefetch=0,
            grid=grid,
            in_specs=[
                # 2/temp scalar in SMEM
                pl.BlockSpec((1, 1), lambda i, j: (0, 0),
                             memory_space=pltpu.MemorySpace.SMEM),
                # batch tile (TB, Dp), resident across the class loop
                pl.BlockSpec((TB, Dp), lambda i, j: (i, 0)),
                # pre-transposed proxy tile (Dp, TC), streamed over classes
                pl.BlockSpec((Dp, TC), lambda i, j: (0, j)),
                # -kappa^2/temp tile, classes on the lane axis
                pl.BlockSpec((1, TC), lambda i, j: (0, j)),
            ],
            out_specs=pl.BlockSpec((TB, 1), lambda i, j: (i, 0)),
            scratch_shapes=[pltpu.VMEM((TB, 1), f32),    # m (running max)
                            pltpu.VMEM((TB, 1), f32)],   # l (running sum)
        ),
        compiler_params=pltpu.CompilerParams(
            dimension_semantics=("parallel", "arbitrary"),
            vmem_limit_bytes=32 * 1024 * 1024,
        ),
    )(two_over_temp, x_p, bT_p, bsq_scaled)

    lse = lse_rows[:B, 0]                              # drop padded rows
    return jnp.mean(lse - pos)


def jax_reference(batch, weight_v, weight_g, temp, labels):
    """Pure-JAX reference of the default forward path (direct (a-b)^2 form)."""
    eps = 1e-12
    bg = jnp.linalg.norm(batch, axis=1, keepdims=True)
    bv = batch / jnp.maximum(bg, eps)
    a = bv * bg
    pv = weight_v / jnp.maximum(jnp.linalg.norm(weight_v, axis=1, keepdims=True), eps)
    kappa = jnp.maximum(weight_g.reshape(-1, 1), 0.1)
    b = pv * kappa
    diff = a[:, None, :] - b[None, :, :]
    sim = -jnp.sum(diff * diff, axis=-1) / temp
    lse = jax.scipy.special.logsumexp(sim, axis=1)
    pos = sim[jnp.arange(batch.shape[0]), labels]
    return jnp.mean(-pos + lse)


if __name__ == "__main__":
    key = jax.random.PRNGKey(0)

    # --- Case 1: small, module-consistent shapes (embed_dim=32, n_classes=16,
    #     batch=8), single grid step. ---
    B, D, C = 8, 32, 16
    concentration = 8.0      # opt.loss_proxyvmf_concentration (xavier gain)
    temp_val = 0.01          # opt.loss_proxyvmf_temp
    # (rho / n_samples are stored by __init__ but unused in forward)

    k_batch, k_w, k_lab, key = jax.random.split(key, 4)
    std = concentration * jnp.sqrt(2.0 / (D + C))
    weight = jax.random.normal(k_w, (C, D), dtype=jnp.float32) * std
    weight_v = weight
    weight_g = jnp.linalg.norm(weight, axis=1, keepdims=True)   # weight_norm(dim=0)
    temp = jnp.float32(temp_val)
    batch = jax.random.normal(k_batch, (B, D), dtype=jnp.float32)
    labels = jax.random.randint(k_lab, (B,), 0, C, dtype=jnp.int32)

    # TODO(synk): subsample_p < 1 and loss_proxyvmf_bindev branches (numpy RNG
    # proxy subsampling / masked binomial-deviance logsumexp) are not
    # implemented; the default config path (subsample_p=1, bindev=False) is
    # what the kernel covers.

    ref = jax_reference(batch, weight_v, weight_g, temp, labels)
    loss = proxynca_l2_loss(batch, weight_v, weight_g, temp, labels)
    jax.block_until_ready(loss)
    assert jnp.allclose(loss, ref, rtol=1e-4, atol=1e-3), (loss, ref)

    # bf16 MXU-feed path: opt-in throughput lever; loose sanity check only
    # (1/temp=100 amplifies bf16 quantization of the cross term).
    loss_bf16 = proxynca_l2_loss(batch, weight_v, weight_g, temp, labels,
                                 compute_dtype=jnp.bfloat16)
    jax.block_until_ready(loss_bf16)
    assert jnp.isfinite(loss_bf16)

    # --- Case 2: multi-tile exercise (several batch tiles + several class
    #     tiles, with padding on both axes) using small explicit tile sizes. ---
    B2, D2, C2 = 20, 48, 200
    k_batch2, k_w2, k_lab2, key = jax.random.split(key, 4)
    std2 = concentration * jnp.sqrt(2.0 / (D2 + C2))
    weight2 = jax.random.normal(k_w2, (C2, D2), dtype=jnp.float32) * std2
    weight_g2 = jnp.linalg.norm(weight2, axis=1, keepdims=True)
    batch2 = jax.random.normal(k_batch2, (B2, D2), dtype=jnp.float32)
    labels2 = jax.random.randint(k_lab2, (B2,), 0, C2, dtype=jnp.int32)

    ref2 = jax_reference(batch2, weight2, weight_g2, temp, labels2)
    loss2 = proxynca_l2_loss(batch2, weight2, weight_g2, temp, labels2,
                             tb=8, tc=128)
    jax.block_until_ready(loss2)
    assert jnp.allclose(loss2, ref2, rtol=1e-4, atol=1e-3), (loss2, ref2)

    print("KERNEL_OK")
</pallas_src>

<mosaic_0001>
module attributes {stable_mosaic.version = 11 : i64} {
  func.func @_proxynca_l2_lse_kernel(%arg0: i32, %arg1: i32, %arg2: memref<1x1xf32, #tpu.memory_space<smem>>, %arg3: memref<8x128xf32, #tpu.memory_space<vmem>>, %arg4: memref<128x128xf32, #tpu.memory_space<vmem>>, %arg5: memref<1x128xf32, #tpu.memory_space<vmem>>, %arg6: memref<8x1xf32, #tpu.memory_space<vmem>>, %arg7: memref<8x1xf32, #tpu.memory_space<vmem>>, %arg8: memref<8x1xf32, #tpu.memory_space<vmem>>) attributes {dimension_semantics = [#tpu.dimension_semantics<parallel>, #tpu.dimension_semantics<arbitrary>], iteration_bounds = array<i64: 1, 1>, scalar_prefetch = 0 : i64, scratch_operands = 2 : i64, tpu.core_type = #tpu.core_type<tc>, window_params = [{transform_indices = @transform_0, window_bounds = array<i64: 1, 1>}, {transform_indices = @transform_1, window_bounds = array<i64: 8, 128>}, {transform_indices = @transform_2, window_bounds = array<i64: 128, 128>}, {transform_indices = @transform_3, window_bounds = array<i64: 1, 128>}, {transform_indices = @transform_4, window_bounds = array<i64: 8, 1>}]} {
    %c0_i32 = arith.constant 0 : i32
    %0 = arith.cmpi eq, %arg1, %c0_i32 : i32
    %1 = arith.extui %0 : i1 to i32
    %c0_i32_0 = arith.constant 0 : i32
    %2 = arith.cmpi ne, %1, %c0_i32_0 : i32
    scf.if %2 {
      %cst_20 = arith.constant 0xFF800000 : f32
      %31 = vector.broadcast %cst_20 : f32 to vector<8x1xf32>
      %c0_21 = arith.constant 0 : index
      %c0_22 = arith.constant 0 : index
      %32 = vector.load %arg7[%c0_21, %c0_22] : memref<8x1xf32, #tpu.memory_space<vmem>>, vector<8x1xf32>
      tpu.vector_store %arg7[%c0_21, %c0_22], %31 {strides = array<i32>} : memref<8x1xf32, #tpu.memory_space<vmem>>, vector<8x1xf32>,
      %cst_23 = arith.constant 0.000000e+00 : f32
      %33 = vector.broadcast %cst_23 : f32 to vector<8x1xf32>
      %c0_24 = arith.constant 0 : index
      %c0_25 = arith.constant 0 : index
      %34 = vector.load %arg8[%c0_24, %c0_25] : memref<8x1xf32, #tpu.memory_space<vmem>>, vector<8x1xf32>
      tpu.vector_store %arg8[%c0_24, %c0_25], %33 {strides = array<i32>} : memref<8x1xf32, #tpu.memory_space<vmem>>, vector<8x1xf32>,
    } else {
    }
    %c0 = arith.constant 0 : index
    %c0_1 = arith.constant 0 : index
    %3 = memref.load %arg2[%c0, %c0_1] : memref<1x1xf32, #tpu.memory_space<smem>>
    %c0_2 = arith.constant 0 : index
    %c0_3 = arith.constant 0 : index
    %4 = vector.load %arg3[%c0_2, %c0_3] : memref<8x128xf32, #tpu.memory_space<vmem>>, vector<8x128xf32>
    %c0_4 = arith.constant 0 : index
    %c0_5 = arith.constant 0 : index
    %5 = vector.load %arg4[%c0_4, %c0_5] : memref<128x128xf32, #tpu.memory_space<vmem>>, vector<128x128xf32>
    %cst = arith.constant dense<0.000000e+00> : vector<8x128xf32>
    %6 = tpu.matmul %4, %5, %cst {dimension_numbers = #tpu.dot_dimension_numbers<[1], [0], [0], [1], [0, 0, 1, 1], [], []>} : vector<8x128xf32>, vector<128x128xf32>, vector<8x128xf32> -> vector<8x128xf32>
    %7 = vector.broadcast %3 : f32 to vector<8x128xf32>
    %8 = arith.mulf %6, %7 : vector<8x128xf32>
    %c0_6 = arith.constant 0 : index
    %c0_7 = arith.constant 0 : index
    %9 = vector.load %arg5[%c0_6, %c0_7] : memref<1x128xf32, #tpu.memory_space<vmem>>, vector<1x128xf32>
    %10 = vector.broadcast %9 : vector<1x128xf32> to vector<8x128xf32>
    %11 = arith.addf %8, %10 : vector<8x128xf32>
    %c0_8 = arith.constant 0 : index
    %c0_9 = arith.constant 0 : index
    %12 = vector.load %arg7[%c0_8, %c0_9] : memref<8x1xf32, #tpu.memory_space<vmem>>, vector<8x1xf32>
    %cst_10 = arith.constant dense<0xFF800000> : vector<8xf32>
    %13 = vector.multi_reduction <maximumf>, %11, %cst_10 [1] : vector<8x128xf32> to vector<8xf32>
    %14 = vector.shape_cast %13 : vector<8xf32> to vector<8x1xf32>
    %15 = arith.maximumf %12, %14 : vector<8x1xf32>
    %c0_11 = arith.constant 0 : index
    %c0_12 = arith.constant 0 : index
    %16 = vector.load %arg8[%c0_11, %c0_12] : memref<8x1xf32, #tpu.memory_space<vmem>>, vector<8x1xf32>
    %17 = arith.subf %12, %15 : vector<8x1xf32>
    %18 = math.exp %17 : vector<8x1xf32>
    %19 = arith.mulf %16, %18 : vector<8x1xf32>
    %20 = vector.broadcast %15 : vector<8x1xf32> to vector<8x128xf32>
    %21 = arith.subf %11, %20 : vector<8x128xf32>
    %22 = math.exp %21 : vector<8x128xf32>
    %cst_13 = arith.constant dense<0.000000e+00> : vector<8xf32>
    %23 = vector.multi_reduction <add>, %22, %cst_13 [1] : vector<8x128xf32> to vector<8xf32>
    %24 = vector.shape_cast %23 : vector<8xf32> to vector<8x1xf32>
    %25 = arith.addf %19, %24 : vector<8x1xf32>
    %c0_14 = arith.constant 0 : index
    %c0_15 = arith.constant 0 : index
    %26 = vector.load %arg8[%c0_14, %c0_15] : memref<8x1xf32, #tpu.memory_space<vmem>>, vector<8x1xf32>
    tpu.vector_store %arg8[%c0_14, %c0_15], %25 {strides = array<i32>} : memref<8x1xf32, #tpu.memory_space<vmem>>, vector<8x1xf32>,
    %c0_16 = arith.constant 0 : index
    %c0_17 = arith.constant 0 : index
    %27 = vector.load %arg7[%c0_16, %c0_17] : memref<8x1xf32, #tpu.memory_space<vmem>>, vector<8x1xf32>
    tpu.vector_store %arg7[%c0_16, %c0_17], %15 {strides = array<i32>} : memref<8x1xf32, #tpu.memory_space<vmem>>, vector<8x1xf32>,
    %c0_i32_18 = arith.constant 0 : i32
    %28 = arith.cmpi eq, %arg1, %c0_i32_18 : i32
    %29 = arith.extui %28 : i1 to i32
    %c0_i32_19 = arith.constant 0 : i32
    %30 = arith.cmpi ne, %29, %c0_i32_19 : i32
    scf.if %30 {
      %c0_20 = arith.constant 0 : index
      %c0_21 = arith.constant 0 : index
      %31 = vector.load %arg7[%c0_20, %c0_21] : memref<8x1xf32, #tpu.memory_space<vmem>>, vector<8x1xf32>
      %c0_22 = arith.constant 0 : index
      %c0_23 = arith.constant 0 : index
      %32 = vector.load %arg8[%c0_22, %c0_23] : memref<8x1xf32, #tpu.memory_space<vmem>>, vector<8x1xf32>
      %33 = math.log %32 : vector<8x1xf32>
      %34 = arith.addf %31, %33 : vector<8x1xf32>
      %c0_24 = arith.constant 0 : index
      %c0_25 = arith.constant 0 : index
      %35 = vector.load %arg6[%c0_24, %c0_25] : memref<8x1xf32, #tpu.memory_space<vmem>>, vector<8x1xf32>
      tpu.vector_store %arg6[%c0_24, %c0_25], %34 {strides = array<i32>} : memref<8x1xf32, #tpu.memory_space<vmem>>, vector<8x1xf32>,
    } else {
    }
    return
  }
  func.func @transform_0(%arg0: i32, %arg1: i32) -> (i32, i32) {
    %c0_i32 = arith.constant 0 : i32
    %c0_i32_0 = arith.constant 0 : i32
    %c0_i32_1 = arith.constant 0 : i32
    return %c0_i32, %c0_i32_0 : i32, i32
  }
  func.func @transform_1(%arg0: i32, %arg1: i32) -> (i32, i32) {
    %c0_i32 = arith.constant 0 : i32
    %c0_i32_0 = arith.constant 0 : i32
    return %arg0, %c0_i32 : i32, i32
  }
  func.func @transform_2(%arg0: i32, %arg1: i32) -> (i32, i32) {
    %c0_i32 = arith.constant 0 : i32
    %c0_i32_0 = arith.constant 0 : i32
    return %c0_i32, %arg1 : i32, i32
  }
  func.func @transform_3(%arg0: i32, %arg1: i32) -> (i32, i32) {
    %c0_i32 = arith.constant 0 : i32
    %c0_i32_0 = arith.constant 0 : i32
    return %c0_i32, %arg1 : i32, i32
  }
  func.func @transform_4(%arg0: i32, %arg1: i32) -> (i32, i32) {
    %c0_i32 = arith.constant 0 : i32
    %c0_i32_0 = arith.constant 0 : i32
    return %arg0, %c0_i32 : i32, i32
  }
}

</mosaic_0001>

<llo_original>
// kernel: tpu_custom_call.1
$region0: #{tpu_custom_call.1}
  #allocation0 [shape = 'u32[]', space=smem, size = 0x4, offset = 0x4, fixed_abs, tag = 'smem constant byte address 0x4 - core index']
  #allocation1 [shape = 'u32[144,128]{1,0:T(1,128)}', space=vmem, size = 0x12000, scoped, tag = 'internal scratch']
  #allocation2 [shape = 'f32[8,1]{1,0:T(8,128)}', space=vmem, size = 0x1000, scoped, tag = 'scratch operand']
  #allocation3 [shape = 'f32[8,1]{1,0:T(8,128)}', space=vmem, size = 0x1000, scoped, tag = 'scratch operand']
  #allocation4 [shape = 'f32[1,1]{1,0:T(1,128)S(6)}', space=smem, size = 0x200, scoped, tag = 'scoped memory for tpu_custom_call.1']
  %s0 = inlined_call_operand.<no memory space> [shape: f32[1,1], index: 0, kind: input, shape index: {}]
  %s1 = inlined_call_operand.hbm [shape: f32[8,128], index: 1, kind: input, shape index: {}]
  %s2 = inlined_call_operand.hbm [shape: f32[128,128], index: 2, kind: input, shape index: {}]
  %s3 = inlined_call_operand.vmem [shape: f32[1,128], index: 3, kind: input, shape index: {}]
  %s4 = inlined_call_operand.vmem [shape: f32[8,1], index: 4, kind: output, shape index: {}]
  %s5 = sld [smem:[#allocation0]]
  $region42: #{tpu_custom_call.1} parent=0
    _
  %s7 = ssub.s32 1, %s5
  %s8 = scalar_select 0, %s7, %s5
  %9 = sst [smem:[#allocation4]] %s0
  $region1: #{tpu_custom_call.1} parent=0
    #allocation5 [shape = 'u8[4096]{0}', space=vmem, size = 0x1000, scoped, tag = 'input window, operand 1, single buffered']
    #allocation6 [shape = 's32[1]{0}', space=sflag, size = 0x4, scoped, tag = 'scoped memory for tpu_custom_call.1']
    #allocation7 [shape = 'u8[65536]{0}', space=vmem, size = 0x10000, scoped, tag = 'input window, operand 2, single buffered']
    #allocation8 [shape = 's32[1]{0}', space=sflag, size = 0x4, scoped, tag = 'scoped memory for tpu_custom_call.1']
    %10 = vsyncpa [#allocation6], 0
    %11 = vsyncpa [#allocation8], 0
    // Predicated region
    $region2: #{tpu_custom_call.1} parent=1 // pred_check
      _
    $region3: #{tpu_custom_call.1} parent=1 // pred_check_branch
      %13 = sbr.rel (0) target = $region5
    $region4: #{tpu_custom_call.1} parent=1 // pred_region
      _
    $region5: #{tpu_custom_call.1} parent=1 // pred_fallthru
      _
    // Predicated region
    $region6: #{tpu_custom_call.1} parent=1 // pred_check
      _
    $region7: #{tpu_custom_call.1} parent=1 // pred_check_branch
      %15 = sbr.rel (0) target = $region9
    $region8: #{tpu_custom_call.1} parent=1 // pred_region
      %s17 = ssub.s32 128, 128
      %18 = vsyncadd [#allocation6], %s17
      %s20 = sshll.u32 [#allocation5], 4
      %s21 = int_to_ptr.vmem [resolvable:$true] %s20
      %23 = dma.hbm_to_vmem [thread:$0]  %s1, 128, %s21, [#allocation6]
    $region9: #{tpu_custom_call.1} parent=1 // pred_fallthru
      _
    // Predicated region
    $region10: #{tpu_custom_call.1} parent=1 // pred_check
      _
    $region11: #{tpu_custom_call.1} parent=1 // pred_check_branch
      %25 = sbr.rel (0) target = $region13
    $region12: #{tpu_custom_call.1} parent=1 // pred_region
      %s27 = ssub.s32 2048, 2048
      %28 = vsyncadd [#allocation8], %s27
      %s29 = sshll.u32 [#allocation7], 4
      %s30 = int_to_ptr.vmem [resolvable:$true] %s29
      %35 = dma.hbm_to_vmem [thread:$0]  %s2, 2048, %s30, [#allocation8], 128, 128, 8
    $region13: #{tpu_custom_call.1} parent=1 // pred_fallthru
      _
    // Predicated region
    $region14: #{tpu_custom_call.1} parent=1 // pred_check
      _
    $region15: #{tpu_custom_call.1} parent=1 // pred_check_branch
      %37 = sbr.rel (0) target = $region17
    $region16: #{tpu_custom_call.1} parent=1 // pred_region
      _
    $region17: #{tpu_custom_call.1} parent=1 // pred_fallthru
      _
    // Predicated region
    $region18: #{tpu_custom_call.1} parent=1 // pred_check
      _
    $region19: #{tpu_custom_call.1} parent=1 // pred_check_branch
      %39 = sbr.rel (0) target = $region21
    $region20: #{tpu_custom_call.1} parent=1 // pred_region
      %40 = dma.done [#allocation6], 128
    $region21: #{tpu_custom_call.1} parent=1 // pred_fallthru
      _
    // Predicated region
    $region22: #{tpu_custom_call.1} parent=1 // pred_check
      _
    $region23: #{tpu_custom_call.1} parent=1 // pred_check_branch
      %42 = sbr.rel (0) target = $region25
    $region24: #{tpu_custom_call.1} parent=1 // pred_region
      %43 = dma.done [#allocation8], 2048
    $region25: #{tpu_custom_call.1} parent=1 // pred_fallthru
      _
    %p44 = scmp.eq.s32.totalorder 0, 0
    // Predicated region
    $region26: #{tpu_custom_call.1} parent=1 // pred_check
      %p45 = pneg %p44
    $region27: #{tpu_custom_call.1} parent=1 // pred_check_branch
      %47 = sbr.rel (%p45) target = $region29
    $region28: #{tpu_custom_call.1} parent=1 // pred_region
      %vm48 = vcmask 7168
      %49 = vst.msk [vmem:[#allocation2] sm:$0xff] %vm48, -inf
      %50 = vst.msk [vmem:[#allocation3] sm:$0xff] %vm48, 0.0
    $region29: #{tpu_custom_call.1} parent=1 // pred_fallthru
      _
    %s51 = sld [smem:[#allocation4]]
    %v52 = vld [vmem:[#allocation5] sm:$0xff]
    %v53 = vld [vmem:[#allocation7] sm:$0xff]
    %v54 = vld [vmem:[#allocation7 + $0x8] sm:$0xff]
    %v55 = vld [vmem:[#allocation7 + $0x10] sm:$0xff]
    %v56 = vld [vmem:[#allocation7 + $0x18] sm:$0xff]
    %v57 = vld [vmem:[#allocation7 + $0x20] sm:$0xff]
    %v58 = vld [vmem:[#allocation7 + $0x28] sm:$0xff]
    %v59 = vld [vmem:[#allocation7 + $0x30] sm:$0xff]
    %v60 = vld [vmem:[#allocation7 + $0x38] sm:$0xff]
    %v61 = vld [vmem:[#allocation7 + $0x40] sm:$0xff]
    %v62 = vld [vmem:[#allocation7 + $0x48] sm:$0xff]
    %v63 = vld [vmem:[#allocation7 + $0x50] sm:$0xff]
    %v64 = vld [vmem:[#allocation7 + $0x58] sm:$0xff]
    %v65 = vld [vmem:[#allocation7 + $0x60] sm:$0xff]
    %v66 = vld [vmem:[#allocation7 + $0x68] sm:$0xff]
    %v67 = vld [vmem:[#allocation7 + $0x70] sm:$0xff]
    %v68 = vld [vmem:[#allocation7 + $0x78] sm:$0xff]
    %69 = vmatprep.subr.mxu0 0.0
    %70 = vmatpush1.msra.mxu0 %v53
    %71 = vmatprep.subr.mxu0 0.0
    %72 = vmatpush1.msra.mxu0 %v54
    %73 = vmatprep.subr.mxu0 0.0
    %74 = vmatpush1.msra.mxu0 %v55
    %75 = vmatprep.subr.mxu0 0.0
    %76 = vmatpush1.msra.mxu0 %v56
    %77 = vmatprep.subr.mxu0 0.0
    %78 = vmatpush1.msra.mxu0 %v57
    %79 = vmatprep.subr.mxu0 0.0
    %80 = vmatpush1.msra.mxu0 %v58
    %81 = vmatprep.subr.mxu0 0.0
    %82 = vmatpush1.msra.mxu0 %v59
    %83 = vmatprep.subr.mxu0 0.0
    %84 = vmatpush1.msra.mxu0 %v60
    %85 = vmatprep.subr.mxu0 0.0
    %86 = vmatpush1.msra.mxu0 %v61
    %87 = vmatprep.subr.mxu0 0.0
    %88 = vmatpush1.msra.mxu0 %v62
    %89 = vmatprep.subr.mxu0 0.0
    %90 = vmatpush1.msra.mxu0 %v63
    %91 = vmatprep.subr.mxu0 0.0
    %92 = vmatpush1.msra.mxu0 %v64
    %93 = vmatprep.subr.mxu0 0.0
    %94 = vmatpush1.msra.mxu0 %v65
    %95 = vmatprep.subr.mxu0 0.0
    %96 = vmatpush1.msra.mxu0 %v66
    %97 = vmatprep.subr.mxu0 0.0
    %98 = vmatpush1.msra.mxu0 %v67
    %99 = vmatprep.subr.mxu0 0.0
    %100 = vmatpush1.msra.mxu0 %v68
    %101 = vmatprep.subr.mxu0 0.0
    %102 = vmatpush1.msra.mxu0 0.0
    %103 = vmatprep.subr.mxu0 0.0
    %104 = vmatpush1.msra.mxu0 0.0
    %105 = vmatprep.subr.mxu0 0.0
    %106 = vmatpush1.msra.mxu0 0.0
    %107 = vmatprep.subr.mxu0 0.0
    %108 = vmatpush1.msra.mxu0 0.0
    %109 = vmatprep.subr.mxu0 0.0
    %110 = vmatpush1.msra.mxu0 0.0
    %111 = vmatprep.subr.mxu0 0.0
    %112 = vmatpush1.msra.mxu0 0.0
    %113 = vmatprep.subr.mxu0 0.0
    %114 = vmatpush1.msra.mxu0 0.0
    %115 = vmatprep.subr.mxu0 0.0
    %116 = vmatpush1.msra.mxu0 0.0
    %117 = vmatprep.subr.mxu0 0.0
    %118 = vmatpush1.msra.mxu0 0.0
    %119 = vmatprep.subr.mxu0 0.0
    %120 = vmatpush1.msra.mxu0 0.0
    %121 = vmatprep.subr.mxu0 0.0
    %122 = vmatpush1.msra.mxu0 0.0
    %123 = vmatprep.subr.mxu0 0.0
    %124 = vmatpush1.msra.mxu0 0.0
    %125 = vmatprep.subr.mxu0 0.0
    %126 = vmatpush1.msra.mxu0 0.0
    %127 = vmatprep.subr.mxu0 0.0
    %128 = vmatpush1.msra.mxu0 0.0
    %129 = vmatprep.subr.mxu0 0.0
    %130 = vmatpush1.msra.mxu0 0.0
    %131 = vmatprep.subr.mxu0 0.0
    %132 = vmatpush1.msra.mxu0 0.0
    %133 = vmatprep.mubr.f32.mxu0 0.0
    %134 = vmatmul.mubr.f32.gmra.mrb[0].mxu0 %v52
    %v135 = vpop.f32.mrb[0].mxu0
    %v136 = vadd.f32 0.0, %v135
    %v137 = vpop.f32.mrb[0].mxu0
    %138 = vdwg.mxu0
    %v139 = vstv %s51
    %v140 = vmul.f32 %v136, %v139
    %v141 = vld [vmem:[%s3] sm:$0x1]
    %v143 = vlaneseq
    %v144 = vshrl.u32 %v143, 7
    %v145 = vsub.s32 0, %v144
    %v146 = vrot.slane %v141, %v145
    %v148 = vadd.f32 %v140, %v146
    %v149 = vld [vmem:[#allocation2] sm:$0xff]
    %150 = vmax.xlane.f32.xlu0 %v148
    %v151 = vpop.xlane.xlu0 %150
    %v152 = vmax.f32 %v149, %v151
    %v153 = vld [vmem:[#allocation3] sm:$0xff]
    %v154 = vsub.f32 %v149, %v152
    %v155 = vmul.f32 %v154, 1.442695
    %v156 = vpow.pop %v155
    %v157 = vmul.f32 %v153, %v156
    %159 = vset.pattern.permute.xlu0 0
    %160 = vperm.xlu0 %159, %v152
    %v161 = vpop.permute.xlu0 %160
    %v163 = vsub.f32 %v148, %v161
    %v164 = vmul.f32 %v163, 1.442695
    %v165 = vpow.pop %v164
    %166 = vadd.xlane.f32.xlu0 %v165
    %v167 = vpop.xlane.xlu0 %166
    %v168 = vadd.f32 %v157, %v167
    %vm169 = vcmask 7168
    %170 = vst.msk [vmem:[#allocation3] sm:$0xff] %vm169, %v168
    %171 = vst.msk [vmem:[#allocation2] sm:$0xff] %vm169, %v152
    // Predicated region
    $region30: #{tpu_custom_call.1} parent=1 // pred_check
      %p172 = pneg %p44
    $region31: #{tpu_custom_call.1} parent=1 // pred_check_branch
      %174 = sbr.rel (%p172) target = $region33
    $region32: #{tpu_custom_call.1} parent=1 // pred_region
      %v175 = vld [vmem:[#allocation2] sm:$0xff]
      %v176 = vld [vmem:[#allocation3] sm:$0xff]
      %v177 = vlog2.pop %v176
      %v178 = vmul.f32 %v177, 0.6931472
      %v179 = vadd.f32 %v175, %v178
      %180 = vst.msk [vmem:[%s4] sm:$0xff] %vm169, %v179
    $region33: #{tpu_custom_call.1} parent=1 // pred_fallthru
      _
    // Predicated region
    $region34: #{tpu_custom_call.1} parent=1 // pred_check
      _
    $region35: #{tpu_custom_call.1} parent=1 // pred_check_branch
      %182 = sbr.rel (0) target = $region37
    $region36: #{tpu_custom_call.1} parent=1 // pred_region
      _
    $region37: #{tpu_custom_call.1} parent=1 // pred_fallthru
      _
    // Predicated region
    $region38: #{tpu_custom_call.1} parent=1 // pred_check
      _
    $region39: #{tpu_custom_call.1} parent=1 // pred_check_branch
      %184 = sbr.rel (0) target = $region41
    $region40: #{tpu_custom_call.1} parent=1 // pred_region
      _
    $region41: #{tpu_custom_call.1} parent=1 // pred_fallthru
      _
    %185 = vsyncpa [#allocation6], 1
    %186 = vsyncpa [#allocation8], 1

</llo_original>
